<compile_context>
chip_gen: v7x
topology: tpu7x:2x2x1
jax: 0.10.0
libtpu: 0.0.40
codegen_flags: <defaults>
</compile_context>

<pallas_src>
import functools
import math

import jax
import jax.numpy as jnp
from jax import lax
from jax.experimental import pallas as pl
from jax.experimental.pallas import tpu as pltpu


# ---------------------------------------------------------------------------
# Kernels
# ---------------------------------------------------------------------------

def _matmul_kernel(x_ref, w_ref, o_ref):
    """o = x @ w  (bf16 MXU operands, f32 accumulation)."""
    o_ref[...] = jnp.dot(
        x_ref[...].astype(jnp.bfloat16),
        w_ref[...].astype(jnp.bfloat16),
        preferred_element_type=jnp.float32,
    ).astype(o_ref.dtype)


def _matmul_bias_kernel(x_ref, w_ref, b_ref, o_ref):
    """o = x @ w + b  (bf16 MXU operands, f32 accumulation + f32 bias add)."""
    acc = jnp.dot(
        x_ref[...].astype(jnp.bfloat16),
        w_ref[...].astype(jnp.bfloat16),
        preferred_element_type=jnp.float32,
    )
    o_ref[...] = (acc + b_ref[...].astype(jnp.float32)).astype(o_ref.dtype)


def _attention_kernel(q_ref, k_ref, v_ref, o_ref, *, head_dim):
    """Causal attention for one (batch, head).  All refs are (T, head_dim)."""
    scale = jnp.float32(1.0 / math.sqrt(head_dim))

    # Fold the 1/sqrt(head_dim) scale into q (commutes with the -inf mask,
    # identical to the reference's post-mask scaling); narrow to bf16 only at
    # the MXU boundary, keep everything elementwise in f32 (v5e-friendly).
    q = (q_ref[...].astype(jnp.float32) * scale).astype(jnp.bfloat16)
    k = k_ref[...].astype(jnp.bfloat16)

    # Scores (T, T): f32 accumulation on the MXU, contracting the head dim.
    s = lax.dot_general(q, k, (((1,), (1,)), ((), ())),
                        preferred_element_type=jnp.float32)

    # Causal mask built from a single (T, T) iota — no per-head replication,
    # no modulo.
    seq = s.shape[0]
    row = lax.broadcasted_iota(jnp.int32, (seq, seq), 0)
    col = lax.broadcasted_iota(jnp.int32, (seq, seq), 1)
    s = jnp.where(row >= col, s, jnp.float32(-jnp.inf))

    # Numerically stable softmax; statistics stay in f32, exact reciprocal
    # (off the critical path, keeps the tolerance tight).
    m = jnp.max(s, axis=-1, keepdims=True)
    p = jnp.exp(s - m)
    denom = jnp.sum(p, axis=-1, keepdims=True)
    p = p / denom

    # TODO(synk): training-mode dropout on p not implemented (eval no-op).

    ctx = jnp.dot(p.astype(jnp.bfloat16), v_ref[...].astype(jnp.bfloat16),
                  preferred_element_type=jnp.float32)
    o_ref[...] = ctx.astype(o_ref.dtype)


# ---------------------------------------------------------------------------
# Wrapper-side helpers
# ---------------------------------------------------------------------------

def _row_tile(rows, max_tile=512):
    """Largest row tile <= max_tile that evenly divides rows (multiple of 8)."""
    if rows <= max_tile:
        return rows
    for t in range(max_tile, 7, -8):
        if rows % t == 0:
            return t
    return rows


def _vmem_limit(block_bytes):
    """Scoped VMEM sized to the tiles (x2 for double-buffering) + headroom."""
    est = 2 * block_bytes + (1 << 20)
    return int(min(max(est, 4 << 20), 32 << 20))   # safe cap on all chips


def _pallas_matmul(x, w, bias=None, *, out_dtype=None):
    """Row-tiled y = x @ w (+ bias) via pallas_call."""
    rows, k = x.shape
    k2, n = w.shape
    assert k == k2
    out_dtype = out_dtype if out_dtype is not None else x.dtype
    tm = _row_tile(rows)
    grid = (rows // tm,)
    block_bytes = 4 * (tm * k + k * n + tm * n + n)
    params = pltpu.CompilerParams(
        dimension_semantics=("parallel",),
        vmem_limit_bytes=_vmem_limit(block_bytes),
    )
    out_shape = jax.ShapeDtypeStruct((rows, n), out_dtype)
    x_spec = pl.BlockSpec((tm, k), lambda i: (i, 0))
    w_spec = pl.BlockSpec((k, n), lambda i: (0, 0))
    o_spec = pl.BlockSpec((tm, n), lambda i: (i, 0))
    if bias is None:
        return pl.pallas_call(
            _matmul_kernel, out_shape=out_shape, grid=grid,
            in_specs=[x_spec, w_spec], out_specs=o_spec,
            compiler_params=params,
        )(x, w)
    b_spec = pl.BlockSpec((1, n), lambda i: (0, 0))
    return pl.pallas_call(
        _matmul_bias_kernel, out_shape=out_shape, grid=grid,
        in_specs=[x_spec, w_spec, b_spec], out_specs=o_spec,
        compiler_params=params,
    )(x, w, bias)


# ---------------------------------------------------------------------------
# Multi-head attention forward
# ---------------------------------------------------------------------------

@functools.partial(jax.jit, static_argnames=("num_heads",))
def multi_head_attention(x, wq, wk, wv, wo, bo, *, num_heads):
    """x: (B, T, d_in); wq/wk/wv: (d_in, d_out); wo: (d_out, d_out); bo: (1, d_out).

    Weights are pre-transposed relative to torch.nn.Linear (y = x @ W).
    """
    b, t, d_in = x.shape
    d_out = wq.shape[1]
    assert d_out % num_heads == 0, "d_out must be divisible by num_heads"
    head_dim = d_out // num_heads

    # ---- (1) fused, lane-dense QKV projection: one big matmul -------------
    x2 = x.reshape(b * t, d_in)
    w_qkv = jnp.concatenate([wq, wk, wv], axis=1)              # (d_in, 3*d_out)
    qkv = _pallas_matmul(x2, w_qkv, out_dtype=jnp.float32)     # (B*T, 3*d_out)

    # wrapper-side layout plumbing: split heads -> (B, H, T, head_dim) each
    qkv = qkv.reshape(b, t, 3, num_heads, head_dim)
    q = qkv[:, :, 0].transpose(0, 2, 1, 3)
    k = qkv[:, :, 1].transpose(0, 2, 1, 3)
    v = qkv[:, :, 2].transpose(0, 2, 1, 3)

    # ---- (2) per-(batch, head) causal attention, grid over (B, H) ---------
    attn_block_bytes = 4 * (3 * t * head_dim + t * t + t * head_dim)
    qkv_spec = pl.BlockSpec((None, None, t, head_dim), lambda bi, hi: (bi, hi, 0, 0))
    ctx = pl.pallas_call(
        functools.partial(_attention_kernel, head_dim=head_dim),
        out_shape=jax.ShapeDtypeStruct((b, num_heads, t, head_dim), jnp.float32),
        grid=(b, num_heads),
        in_specs=[qkv_spec, qkv_spec, qkv_spec],
        out_specs=pl.BlockSpec((None, None, t, head_dim),
                               lambda bi, hi: (bi, hi, 0, 0)),
        compiler_params=pltpu.CompilerParams(
            dimension_semantics=("parallel", "parallel"),
            vmem_limit_bytes=_vmem_limit(attn_block_bytes),
        ),
    )(q, k, v)                                                  # (B, H, T, hd)

    # ---- (3) output projection: single full-depth K = d_out matmul --------
    ctx2 = ctx.transpose(0, 2, 1, 3).reshape(b * t, d_out)      # head-major cols
    out2 = _pallas_matmul(ctx2, wo, bias=bo, out_dtype=x.dtype)
    return out2.reshape(b, t, d_out)


# ---------------------------------------------------------------------------
# Pure-JAX reference (mirrors the PyTorch forward in eval mode, f32 throughout)
# ---------------------------------------------------------------------------

def reference(x, wq, wk, wv, wo, bo, *, num_heads):
    b, t, _ = x.shape
    d_out = wq.shape[1]
    head_dim = d_out // num_heads
    q = (x @ wq).reshape(b, t, num_heads, head_dim).transpose(0, 2, 1, 3)
    k = (x @ wk).reshape(b, t, num_heads, head_dim).transpose(0, 2, 1, 3)
    v = (x @ wv).reshape(b, t, num_heads, head_dim).transpose(0, 2, 1, 3)
    s = jnp.einsum("bhqd,bhkd->bhqk", q, k)
    mask = jnp.triu(jnp.ones((t, t), bool), k=1)
    s = jnp.where(mask, -jnp.inf, s)
    w = jax.nn.softmax(s / (head_dim ** 0.5), axis=-1)
    ctx = jnp.einsum("bhqk,bhkd->bhqd", w, v).transpose(0, 2, 1, 3)
    ctx = ctx.reshape(b, t, d_out)
    return ctx @ wo + bo


if __name__ == "__main__":
    # Small shapes consistent with the module (context_length == num_tokens).
    B, T, D_IN, D_OUT, NUM_HEADS = 2, 8, 32, 32, 4

    key = jax.random.PRNGKey(0)
    kx, kq, kk, kv, kwo, kbo = jax.random.split(key, 6)

    x = jax.random.normal(kx, (B, T, D_IN), dtype=jnp.float32)
    wq = jax.random.normal(kq, (D_IN, D_OUT), dtype=jnp.float32) * 0.1
    wk = jax.random.normal(kk, (D_IN, D_OUT), dtype=jnp.float32) * 0.1
    wv = jax.random.normal(kv, (D_IN, D_OUT), dtype=jnp.float32) * 0.1
    wo = jax.random.normal(kwo, (D_OUT, D_OUT), dtype=jnp.float32) * 0.1
    bo = jax.random.normal(kbo, (1, D_OUT), dtype=jnp.float32) * 0.1

    out = multi_head_attention(x, wq, wk, wv, wo, bo, num_heads=NUM_HEADS)
    out = jax.block_until_ready(out)

    ref = reference(x, wq, wk, wv, wo, bo, num_heads=NUM_HEADS)
    assert out.shape == (B, T, D_OUT)
    # Tolerance accounts for bf16 MXU operands (f32 accumulation) vs the f32
    # reference; softmax statistics and the reciprocal are exact f32.
    assert jnp.allclose(out, ref, atol=2e-2, rtol=2e-2), "mismatch vs reference"

    print("KERNEL_OK")
</pallas_src>

<mosaic_0001>
module attributes {stable_mosaic.version = 11 : i64} {
  func.func @_matmul_kernel(%arg0: i32, %arg1: memref<16x32xf32, #tpu.memory_space<vmem>>, %arg2: memref<32x96xf32, #tpu.memory_space<vmem>>, %arg3: memref<16x96xf32, #tpu.memory_space<vmem>>) attributes {dimension_semantics = [#tpu.dimension_semantics<parallel>], iteration_bounds = array<i64: 1>, scalar_prefetch = 0 : i64, scratch_operands = 0 : i64, tpu.core_type = #tpu.core_type<tc>, window_params = [{transform_indices = @transform_0, window_bounds = array<i64: 16, 32>}, {pipeline_mode = #tpu.pipeline_mode<synchronous>, transform_indices = @transform_1, window_bounds = array<i64: 32, 96>}, {transform_indices = @transform_2, window_bounds = array<i64: 16, 96>}]} {
    %c0 = arith.constant 0 : index
    %c0_0 = arith.constant 0 : index
    %0 = vector.load %arg1[%c0, %c0_0] : memref<16x32xf32, #tpu.memory_space<vmem>>, vector<16x32xf32>
    %1 = arith.truncf %0 : vector<16x32xf32> to vector<16x32xbf16>
    %c0_1 = arith.constant 0 : index
    %c0_2 = arith.constant 0 : index
    %2 = vector.load %arg2[%c0_1, %c0_2] : memref<32x96xf32, #tpu.memory_space<vmem>>, vector<32x96xf32>
    %3 = arith.truncf %2 : vector<32x96xf32> to vector<32x96xbf16>
    %cst = arith.constant dense<0.000000e+00> : vector<16x96xf32>
    %4 = tpu.matmul %1, %3, %cst {dimension_numbers = #tpu.dot_dimension_numbers<[1], [0], [0], [1], [0, 0, 1, 1], [], []>} : vector<16x32xbf16>, vector<32x96xbf16>, vector<16x96xf32> -> vector<16x96xf32>
    %c0_3 = arith.constant 0 : index
    %c0_4 = arith.constant 0 : index
    %5 = vector.load %arg3[%c0_3, %c0_4] : memref<16x96xf32, #tpu.memory_space<vmem>>, vector<16x96xf32>
    tpu.vector_store %arg3[%c0_3, %c0_4], %4 {strides = array<i32>} : memref<16x96xf32, #tpu.memory_space<vmem>>, vector<16x96xf32>,
    return
  }
  func.func @transform_0(%arg0: i32) -> (i32, i32) {
    %c0_i32 = arith.constant 0 : i32
    %c0_i32_0 = arith.constant 0 : i32
    return %arg0, %c0_i32 : i32, i32
  }
  func.func @transform_1(%arg0: i32) -> (i32, i32) {
    %c0_i32 = arith.constant 0 : i32
    %c0_i32_0 = arith.constant 0 : i32
    %c0_i32_1 = arith.constant 0 : i32
    return %c0_i32, %c0_i32_0 : i32, i32
  }
  func.func @transform_2(%arg0: i32) -> (i32, i32) {
    %c0_i32 = arith.constant 0 : i32
    %c0_i32_0 = arith.constant 0 : i32
    return %arg0, %c0_i32 : i32, i32
  }
}

module attributes {stable_mosaic.version = 11 : i64} {
  func.func @_attention_kernel(%arg0: i32, %arg1: i32, %arg2: memref<1x1x8x8xf32, #tpu.memory_space<vmem>>, %arg3: memref<1x1x8x8xf32, #tpu.memory_space<vmem>>, %arg4: memref<1x1x8x8xf32, #tpu.memory_space<vmem>>, %arg5: memref<1x1x8x8xf32, #tpu.memory_space<vmem>>) attributes {dimension_semantics = [#tpu.dimension_semantics<parallel>, #tpu.dimension_semantics<parallel>], iteration_bounds = array<i64: 2, 4>, scalar_prefetch = 0 : i64, scratch_operands = 0 : i64, tpu.core_type = #tpu.core_type<tc>, window_params = [{transform_indices = @transform_0, window_bounds = array<i64: 1, 1, 8, 8>}, {transform_indices = @transform_1, window_bounds = array<i64: 1, 1, 8, 8>}, {transform_indices = @transform_2, window_bounds = array<i64: 1, 1, 8, 8>}, {transform_indices = @transform_3, window_bounds = array<i64: 1, 1, 8, 8>}]} {
    %c0 = arith.constant 0 : index
    %c0_0 = arith.constant 0 : index
    %c0_1 = arith.constant 0 : index
    %c0_2 = arith.constant 0 : index
    %0 = vector.load %arg2[%c0, %c0_0, %c0_1, %c0_2] : memref<1x1x8x8xf32, #tpu.memory_space<vmem>>, vector<1x1x8x8xf32>
    %1 = vector.shape_cast %0 : vector<1x1x8x8xf32> to vector<8x8xf32>
    %cst = arith.constant 0.353553385 : f32
    %2 = vector.broadcast %cst : f32 to vector<8x8xf32>
    %3 = arith.mulf %1, %2 : vector<8x8xf32>
    %4 = arith.truncf %3 : vector<8x8xf32> to vector<8x8xbf16>
    %c0_3 = arith.constant 0 : index
    %c0_4 = arith.constant 0 : index
    %c0_5 = arith.constant 0 : index
    %c0_6 = arith.constant 0 : index
    %5 = vector.load %arg3[%c0_3, %c0_4, %c0_5, %c0_6] : memref<1x1x8x8xf32, #tpu.memory_space<vmem>>, vector<1x1x8x8xf32>
    %6 = vector.shape_cast %5 : vector<1x1x8x8xf32> to vector<8x8xf32>
    %7 = arith.truncf %6 : vector<8x8xf32> to vector<8x8xbf16>
    %cst_7 = arith.constant dense<0.000000e+00> : vector<8x8xf32>
    %8 = tpu.matmul %4, %7, %cst_7 {dimension_numbers = #tpu.dot_dimension_numbers<[1], [1], [0], [0], [0, 0, 1, 0], [], []>} : vector<8x8xbf16>, vector<8x8xbf16>, vector<8x8xf32> -> vector<8x8xf32>
    %9 = tpu.iota {dimensions = array<i32: 0>} : vector<8x8xi32>
    %10 = tpu.iota {dimensions = array<i32: 1>} : vector<8x8xi32>
    %11 = arith.cmpi sge, %9, %10 : vector<8x8xi32>
    %cst_8 = arith.constant 0xFF800000 : f32
    %12 = vector.broadcast %cst_8 : f32 to vector<8x8xf32>
    %13 = arith.select %11, %8, %12 : vector<8x8xi1>, vector<8x8xf32>
    %cst_9 = arith.constant dense<0xFF800000> : vector<8xf32>
    %14 = vector.multi_reduction <maximumf>, %13, %cst_9 [1] : vector<8x8xf32> to vector<8xf32>
    %15 = vector.shape_cast %14 : vector<8xf32> to vector<8x1xf32>
    %16 = vector.broadcast %15 : vector<8x1xf32> to vector<8x8xf32>
    %17 = arith.subf %13, %16 : vector<8x8xf32>
    %18 = math.exp %17 : vector<8x8xf32>
    %cst_10 = arith.constant dense<0.000000e+00> : vector<8xf32>
    %19 = vector.multi_reduction <add>, %18, %cst_10 [1] : vector<8x8xf32> to vector<8xf32>
    %20 = vector.shape_cast %19 : vector<8xf32> to vector<8x1xf32>
    %21 = vector.broadcast %20 : vector<8x1xf32> to vector<8x8xf32>
    %22 = arith.divf %18, %21 : vector<8x8xf32>
    %23 = arith.truncf %22 : vector<8x8xf32> to vector<8x8xbf16>
    %c0_11 = arith.constant 0 : index
    %c0_12 = arith.constant 0 : index
    %c0_13 = arith.constant 0 : index
    %c0_14 = arith.constant 0 : index
    %24 = vector.load %arg4[%c0_11, %c0_12, %c0_13, %c0_14] : memref<1x1x8x8xf32, #tpu.memory_space<vmem>>, vector<1x1x8x8xf32>
    %25 = vector.shape_cast %24 : vector<1x1x8x8xf32> to vector<8x8xf32>
    %26 = arith.truncf %25 : vector<8x8xf32> to vector<8x8xbf16>
    %cst_15 = arith.constant dense<0.000000e+00> : vector<8x8xf32>
    %27 = tpu.matmul %23, %26, %cst_15 {dimension_numbers = #tpu.dot_dimension_numbers<[1], [0], [0], [1], [0, 0, 1, 1], [], []>} : vector<8x8xbf16>, vector<8x8xbf16>, vector<8x8xf32> -> vector<8x8xf32>
    %c0_16 = arith.constant 0 : index
    %c0_17 = arith.constant 0 : index
    %c0_18 = arith.constant 0 : index
    %c0_19 = arith.constant 0 : index
    %28 = vector.load %arg5[%c0_16, %c0_17, %c0_18, %c0_19] : memref<1x1x8x8xf32, #tpu.memory_space<vmem>>, vector<1x1x8x8xf32>
    %29 = vector.shape_cast %28 : vector<1x1x8x8xf32> to vector<8x8xf32>
    %30 = vector.shape_cast %27 : vector<8x8xf32> to vector<1x1x8x8xf32>
    tpu.vector_store %arg5[%c0_16, %c0_17, %c0_18, %c0_19], %30 {strides = array<i32>} : memref<1x1x8x8xf32, #tpu.memory_space<vmem>>, vector<1x1x8x8xf32>,
    return
  }
  func.func @transform_0(%arg0: i32, %arg1: i32) -> (i32, i32, i32, i32) {
    %c0_i32 = arith.constant 0 : i32
    %c0_i32_0 = arith.constant 0 : i32
    %c0_i32_1 = arith.constant 0 : i32
    return %arg0, %arg1, %c0_i32, %c0_i32_0 : i32, i32, i32, i32
  }
  func.func @transform_1(%arg0: i32, %arg1: i32) -> (i32, i32, i32, i32) {
    %c0_i32 = arith.constant 0 : i32
    %c0_i32_0 = arith.constant 0 : i32
    %c0_i32_1 = arith.constant 0 : i32
    return %arg0, %arg1, %c0_i32, %c0_i32_0 : i32, i32, i32, i32
  }
  func.func @transform_2(%arg0: i32, %arg1: i32) -> (i32, i32, i32, i32) {
    %c0_i32 = arith.constant 0 : i32
    %c0_i32_0 = arith.constant 0 : i32
    %c0_i32_1 = arith.constant 0 : i32
    return %arg0, %arg1, %c0_i32, %c0_i32_0 : i32, i32, i32, i32
  }
  func.func @transform_3(%arg0: i32, %arg1: i32) -> (i32, i32, i32, i32) {
    %c0_i32 = arith.constant 0 : i32
    %c0_i32_0 = arith.constant 0 : i32
    %c0_i32_1 = arith.constant 0 : i32
    return %arg0, %arg1, %c0_i32, %c0_i32_0 : i32, i32, i32, i32
  }
}

module attributes {stable_mosaic.version = 11 : i64} {
  func.func @_matmul_bias_kernel(%arg0: i32, %arg1: memref<16x32xf32, #tpu.memory_space<vmem>>, %arg2: memref<32x32xf32, #tpu.memory_space<vmem>>, %arg3: memref<1x32xf32, #tpu.memory_space<vmem>>, %arg4: memref<16x32xf32, #tpu.memory_space<vmem>>) attributes {dimension_semantics = [#tpu.dimension_semantics<parallel>], iteration_bounds = array<i64: 1>, scalar_prefetch = 0 : i64, scratch_operands = 0 : i64, tpu.core_type = #tpu.core_type<tc>, window_params = [{transform_indices = @transform_0, window_bounds = array<i64: 16, 32>}, {pipeline_mode = #tpu.pipeline_mode<synchronous>, transform_indices = @transform_1, window_bounds = array<i64: 32, 32>}, {pipeline_mode = #tpu.pipeline_mode<synchronous>, transform_indices = @transform_2, window_bounds = array<i64: 1, 32>}, {transform_indices = @transform_3, window_bounds = array<i64: 16, 32>}]} {
    %c0 = arith.constant 0 : index
    %c0_0 = arith.constant 0 : index
    %0 = vector.load %arg1[%c0, %c0_0] : memref<16x32xf32, #tpu.memory_space<vmem>>, vector<16x32xf32>
    %1 = arith.truncf %0 : vector<16x32xf32> to vector<16x32xbf16>
    %c0_1 = arith.constant 0 : index
    %c0_2 = arith.constant 0 : index
    %2 = vector.load %arg2[%c0_1, %c0_2] : memref<32x32xf32, #tpu.memory_space<vmem>>, vector<32x32xf32>
    %3 = arith.truncf %2 : vector<32x32xf32> to vector<32x32xbf16>
    %cst = arith.constant dense<0.000000e+00> : vector<16x32xf32>
    %4 = tpu.matmul %1, %3, %cst {dimension_numbers = #tpu.dot_dimension_numbers<[1], [0], [0], [1], [0, 0, 1, 1], [], []>} : vector<16x32xbf16>, vector<32x32xbf16>, vector<16x32xf32> -> vector<16x32xf32>
    %c0_3 = arith.constant 0 : index
    %c0_4 = arith.constant 0 : index
    %5 = vector.load %arg3[%c0_3, %c0_4] : memref<1x32xf32, #tpu.memory_space<vmem>>, vector<1x32xf32>
    %6 = vector.broadcast %5 : vector<1x32xf32> to vector<16x32xf32>
    %7 = arith.addf %4, %6 : vector<16x32xf32>
    %c0_5 = arith.constant 0 : index
    %c0_6 = arith.constant 0 : index
    %8 = vector.load %arg4[%c0_5, %c0_6] : memref<16x32xf32, #tpu.memory_space<vmem>>, vector<16x32xf32>
    tpu.vector_store %arg4[%c0_5, %c0_6], %7 {strides = array<i32>} : memref<16x32xf32, #tpu.memory_space<vmem>>, vector<16x32xf32>,
    return
  }
  func.func @transform_0(%arg0: i32) -> (i32, i32) {
    %c0_i32 = arith.constant 0 : i32
    %c0_i32_0 = arith.constant 0 : i32
    return %arg0, %c0_i32 : i32, i32
  }
  func.func @transform_1(%arg0: i32) -> (i32, i32) {
    %c0_i32 = arith.constant 0 : i32
    %c0_i32_0 = arith.constant 0 : i32
    %c0_i32_1 = arith.constant 0 : i32
    return %c0_i32, %c0_i32_0 : i32, i32
  }
  func.func @transform_2(%arg0: i32) -> (i32, i32) {
    %c0_i32 = arith.constant 0 : i32
    %c0_i32_0 = arith.constant 0 : i32
    %c0_i32_1 = arith.constant 0 : i32
    return %c0_i32, %c0_i32_0 : i32, i32
  }
  func.func @transform_3(%arg0: i32) -> (i32, i32) {
    %c0_i32 = arith.constant 0 : i32
    %c0_i32_0 = arith.constant 0 : i32
    return %arg0, %c0_i32 : i32, i32
  }
}

</mosaic_0001>

<llo_original>
// kernel: multi_head_attention.3
$region0: #{multi_head_attention.3}
  #allocation0 [shape = 'u32[]', space=smem, size = 0x4, offset = 0x4, fixed_abs, tag = 'smem constant byte address 0x4 - core index']
  #allocation1 [shape = 'u32[144,128]{1,0:T(1,128)}', space=vmem, size = 0x12000, scoped, tag = 'internal scratch']
  %s0 = inlined_call_operand.vmem [shape: f32[16,32], index: 0, kind: input, shape index: {}]
  %s1 = inlined_call_operand.vmem [shape: f32[32,96], index: 1, kind: input, shape index: {}]
  %s2 = inlined_call_operand.vmem [shape: f32[16,96], index: 2, kind: output, shape index: {}]
  %s3 = sld [smem:[#allocation0]]
  $region18: #{multi_head_attention.3} parent=0
    _
  %s5 = ssub.s32 1, %s3
  %s6 = scalar_select 0, %s5, %s3
  // Predicated region
  $region2: #{multi_head_attention.3} parent=0 // pred_check
    _
  $region3: #{multi_head_attention.3} parent=0 // pred_check_branch
    %8 = sbr.rel (0) target = $region5
  $region4: #{multi_head_attention.3} parent=0 // pred_region
    _
  $region5: #{multi_head_attention.3} parent=0 // pred_fallthru
    _
  // Predicated region
  $region6: #{multi_head_attention.3} parent=0 // pred_check
    _
  $region7: #{multi_head_attention.3} parent=0 // pred_check_branch
    %10 = sbr.rel (0) target = $region9
  $region8: #{multi_head_attention.3} parent=0 // pred_region
    _
  $region9: #{multi_head_attention.3} parent=0 // pred_fallthru
    _
  %v12 = vld [vmem:[%s0] sm:$0xff]
  %v13 = vld [vmem:[%s0 + $0x8] sm:$0xff]
  %v14 = vpack.c.bf16 %v13, %v12
  %v15 = vld [vmem:[%s1] sm:$0xff]
  %v16 = vld [vmem:[%s1 + $0x8] sm:$0xff]
  %v17 = vld [vmem:[%s1 + $0x10] sm:$0xff]
  %v18 = vld [vmem:[%s1 + $0x18] sm:$0xff]
  %v19 = vpack.c.bf16 %v16, %v15
  %v20 = vpack.c.bf16 %v18, %v17
  %vm21 = vcmask 261120
  %v23 = vsel %vm21, %v14, 0
  %25 = vmatprep.subr.bf16.mxu0 0
  %26 = vmatpush1.bf16.msra.mxu0 %v19
  %27 = vmatprep.subr.bf16.mxu0 0
  %28 = vmatpush1.bf16.msra.mxu0 %v20
  %29 = vmatprep.subr.bf16.mxu0 0
  %30 = vmatpush1.bf16.msra.mxu0 0
  %31 = vmatprep.subr.bf16.mxu0 0
  %32 = vmatpush1.bf16.msra.mxu0 0
  %33 = vmatprep.subr.bf16.mxu0 0
  %34 = vmatpush1.bf16.msra.mxu0 0
  %35 = vmatprep.subr.bf16.mxu0 0
  %36 = vmatpush1.bf16.msra.mxu0 0
  %37 = vmatprep.subr.bf16.mxu0 0
  %38 = vmatpush1.bf16.msra.mxu0 0
  %39 = vmatprep.subr.bf16.mxu0 0
  %40 = vmatpush1.bf16.msra.mxu0 0
  %41 = vmatprep.subr.bf16.mxu0 0
  %42 = vmatpush1.bf16.msra.mxu0 0
  %43 = vmatprep.subr.bf16.mxu0 0
  %44 = vmatpush1.bf16.msra.mxu0 0
  %45 = vmatprep.subr.bf16.mxu0 0
  %46 = vmatpush1.bf16.msra.mxu0 0
  %47 = vmatprep.subr.bf16.mxu0 0
  %48 = vmatpush1.bf16.msra.mxu0 0
  %49 = vmatprep.subr.bf16.mxu0 0
  %50 = vmatpush1.bf16.msra.mxu0 0
  %51 = vmatprep.subr.bf16.mxu0 0
  %52 = vmatpush1.bf16.msra.mxu0 0
  %53 = vmatprep.subr.bf16.mxu0 0
  %54 = vmatpush1.bf16.msra.mxu0 0
  %55 = vmatprep.subr.bf16.mxu0 0
  %56 = vmatpush1.bf16.msra.mxu0 0
  %57 = vmatprep.mubr.bf16.mxu0 0
  %58 = vmatmul.mubr.bf16.gmra.mrb[0].mxu0 %v23
  %v59 = vpop.f32.mrb[0].mxu0
  %v60 = vadd.f32 0.0, %v59
  %v61 = vpop.f32.mrb[0].mxu0
  %v62 = vpop.f32.mrb[0].mxu0
  %v63 = vadd.f32 0.0, %v62
  %v64 = vpop.f32.mrb[0].mxu0
  %65 = vdwg.mxu0
  %vm66 = vcmask 785408
  %67 = vst.msk [vmem:[%s2] sm:$0xff] %vm66, %v60
  %68 = vst.msk [vmem:[%s2 + $0x8] sm:$0xff] %vm66, %v63
  // Predicated region
  $region10: #{multi_head_attention.3} parent=0 // pred_check
    _
  $region11: #{multi_head_attention.3} parent=0 // pred_check_branch
    %70 = sbr.rel (0) target = $region13
  $region12: #{multi_head_attention.3} parent=0 // pred_region
    _
  $region13: #{multi_head_attention.3} parent=0 // pred_fallthru
    _
  // Predicated region
  $region14: #{multi_head_attention.3} parent=0 // pred_check
    _
  $region15: #{multi_head_attention.3} parent=0 // pred_check_branch
    %72 = sbr.rel (0) target = $region17
  $region16: #{multi_head_attention.3} parent=0 // pred_region
    _
  $region17: #{multi_head_attention.3} parent=0 // pred_fallthru
    _

// kernel: multi_head_attention.5
$region0: #{multi_head_attention.5}
  #allocation0 [shape = 'u32[]', space=smem, size = 0x4, offset = 0x4, fixed_abs, tag = 'smem constant byte address 0x4 - core index']
  #allocation1 [shape = 'u32[144,128]{1,0:T(1,128)}', space=vmem, size = 0x12000, scoped, tag = 'internal scratch']
  %s0 = inlined_call_operand.vmem [shape: f32[16,32], index: 0, kind: input, shape index: {}]
  %s1 = inlined_call_operand.vmem [shape: f32[32,32], index: 1, kind: input, shape index: {}]
  %s2 = inlined_call_operand.vmem [shape: f32[1,32], index: 2, kind: input, shape index: {}]
  %s3 = inlined_call_operand.hbm [shape: f32[16,32], index: 3, kind: output, shape index: {}]
  %s4 = sld [smem:[#allocation0]]
  $region22: #{multi_head_attention.5} parent=0
    _
  %s6 = ssub.s32 1, %s4
  %s7 = scalar_select 0, %s6, %s4
  $region1: #{multi_head_attention.5} parent=0
    #allocation2 [shape = 'u8[8192]{0}', space=vmem, size = 0x2000, scoped, tag = 'output window, operand 0, single buffered']
    #allocation3 [shape = 's32[1]{0}', space=sflag, size = 0x4, scoped, tag = 'scoped memory for multi_head_attention.5']
    %8 = vsyncpa [#allocation3], 0
    // Predicated region
    $region2: #{multi_head_attention.5} parent=1 // pred_check
      _
    $region3: #{multi_head_attention.5} parent=1 // pred_check_branch
      %10 = sbr.rel (0) target = $region5
    $region4: #{multi_head_attention.5} parent=1 // pred_region
      _
    $region5: #{multi_head_attention.5} parent=1 // pred_fallthru
      _
    // Predicated region
    $region6: #{multi_head_attention.5} parent=1 // pred_check
      _
    $region7: #{multi_head_attention.5} parent=1 // pred_check_branch
      %12 = sbr.rel (0) target = $region9
    $region8: #{multi_head_attention.5} parent=1 // pred_region
      _
    $region9: #{multi_head_attention.5} parent=1 // pred_fallthru
      _
    // Predicated region
    $region10: #{multi_head_attention.5} parent=1 // pred_check
      _
    $region11: #{multi_head_attention.5} parent=1 // pred_check_branch
      %14 = sbr.rel (0) target = $region13
    $region12: #{multi_head_attention.5} parent=1 // pred_region
      _
    $region13: #{multi_head_attention.5} parent=1 // pred_fallthru
      _
    %v16 = vld [vmem:[%s0] sm:$0xff]
    %v17 = vld [vmem:[%s0 + $0x8] sm:$0xff]
    %v18 = vpack.c.bf16 %v17, %v16
    %v19 = vld [vmem:[%s1] sm:$0xff]
    %v20 = vld [vmem:[%s1 + $0x8] sm:$0xff]
    %v21 = vld [vmem:[%s1 + $0x10] sm:$0xff]
    %v22 = vld [vmem:[%s1 + $0x18] sm:$0xff]
    %v23 = vpack.c.bf16 %v20, %v19
    %v24 = vpack.c.bf16 %v22, %v21
    %v25 = vld [vmem:[%s2] sm:$0x1]
    %v27 = vlaneseq
    %v28 = vshrl.u32 %v27, 7
    %v29 = vsub.s32 0, %v28
    %v30 = vrot.slane %v25, %v29
    %vm32 = vcmask 261120
    %v34 = vsel %vm32, %v18, 0
    %36 = vmatprep.subr.bf16.mxu0 0
    %37 = vmatpush1.bf16.msra.mxu0 %v23
    %38 = vmatprep.subr.bf16.mxu0 0
    %39 = vmatpush1.bf16.msra.mxu0 %v24
    %40 = vmatprep.subr.bf16.mxu0 0
    %41 = vmatpush1.bf16.msra.mxu0 0
    %42 = vmatprep.subr.bf16.mxu0 0
    %43 = vmatpush1.bf16.msra.mxu0 0
    %44 = vmatprep.subr.bf16.mxu0 0
    %45 = vmatpush1.bf16.msra.mxu0 0
    %46 = vmatprep.subr.bf16.mxu0 0
    %47 = vmatpush1.bf16.msra.mxu0 0
    %48 = vmatprep.subr.bf16.mxu0 0
    %49 = vmatpush1.bf16.msra.mxu0 0
    %50 = vmatprep.subr.bf16.mxu0 0
    %51 = vmatpush1.bf16.msra.mxu0 0
    %52 = vmatprep.subr.bf16.mxu0 0
    %53 = vmatpush1.bf16.msra.mxu0 0
    %54 = vmatprep.subr.bf16.mxu0 0
    %55 = vmatpush1.bf16.msra.mxu0 0
    %56 = vmatprep.subr.bf16.mxu0 0
    %57 = vmatpush1.bf16.msra.mxu0 0
    %58 = vmatprep.subr.bf16.mxu0 0
    %59 = vmatpush1.bf16.msra.mxu0 0
    %60 = vmatprep.subr.bf16.mxu0 0
    %61 = vmatpush1.bf16.msra.mxu0 0
    %62 = vmatprep.subr.bf16.mxu0 0
    %63 = vmatpush1.bf16.msra.mxu0 0
    %64 = vmatprep.subr.bf16.mxu0 0
    %65 = vmatpush1.bf16.msra.mxu0 0
    %66 = vmatprep.subr.bf16.mxu0 0
    %67 = vmatpush1.bf16.msra.mxu0 0
    %68 = vmatprep.mubr.bf16.mxu0 0
    %69 = vmatmul.mubr.bf16.gmra.mrb[0].mxu0 %v34
    %v70 = vpop.f32.mrb[0].mxu0
    %v71 = vadd.f32 %v30, %v70
    %v72 = vpop.f32.mrb[0].mxu0
    %v73 = vpop.f32.mrb[0].mxu0
    %v74 = vadd.f32 %v30, %v73
    %v75 = vpop.f32.mrb[0].mxu0
    %76 = vdwg.mxu0
    %77 = vst.msk [vmem:[#allocation2] sm:$0xff] %vm32, %v71
    %78 = vst.msk [vmem:[#allocation2 + $0x8] sm:$0xff] %vm32, %v74
    // Predicated region
    $region14: #{multi_head_attention.5} parent=1 // pred_check
      _
    $region15: #{multi_head_attention.5} parent=1 // pred_check_branch
      %80 = sbr.rel (0) target = $region17
    $region16: #{multi_head_attention.5} parent=1 // pred_region
      %s82 = ssub.s32 256, 256
      %83 = vsyncadd [#allocation3], %s82
      %s84 = sshll.u32 [#allocation2], 4
      %s85 = int_to_ptr.vmem [resolvable:$true] %s84
      %90 = dma.vmem_to_hbm [thread:$0]  %s85, 256, %s3, [#allocation3], 128, 128, 8
    $region17: #{multi_head_attention.5} parent=1 // pred_fallthru
      _
    // Predicated region
    $region18: #{multi_head_attention.5} parent=1 // pred_check
      _
    $region19: #{multi_head_attention.5} parent=1 // pred_check_branch
      %92 = sbr.rel (0) target = $region21
    $region20: #{multi_head_attention.5} parent=1 // pred_region
      %93 = dma.done [#allocation3], 256
    $region21: #{multi_head_attention.5} parent=1 // pred_fallthru
      _
    %94 = vsyncpa [#allocation3], 1

// kernel: multi_head_attention.4
$region0: #{multi_head_attention.4}
  #allocation0 [shape = 'u32[]', space=smem, size = 0x4, offset = 0x4, fixed_abs, tag = 'smem constant byte address 0x4 - core index']
  #allocation1 [shape = 'u32[144,128]{1,0:T(1,128)}', space=vmem, size = 0x12000, scoped, tag = 'internal scratch']
  %s0 = inlined_call_operand.vmem [shape: f32[2,4,8,8], index: 0, kind: input, shape index: {}]
  %s1 = inlined_call_operand.vmem [shape: f32[2,4,8,8], index: 1, kind: input, shape index: {}]
  %s2 = inlined_call_operand.vmem [shape: f32[2,4,8,8], index: 2, kind: input, shape index: {}]
  %s3 = inlined_call_operand.vmem [shape: f32[2,4,8,8], index: 3, kind: output, shape index: {}]
  %s4 = sld [smem:[#allocation0]]
  $region45: #{multi_head_attention.4} parent=0
    _
  %s6 = ssub.s32 1, %s4
  %s7 = scalar_select 0, %s6, %s4
  loop: start=0, step=1, limit=10
  $region2: #{multi_head_attention.4} parent=0 // loop_pre_header
    _
  $region3: #{multi_head_attention.4} parent=0 // loop_header
    %s9 = sphi 0, %s13
    %p10 = scmp.ge.s32.totalorder %s9, 10
    %s16 = sphi 0, %s28
    %s17 = sphi 0, %s24
    %s18 = sphi 0, %s16
    %s19 = sphi 0, %s17
    %s20 = sphi 0, %s18
    %s21 = sphi 0, %s19
    %s33 = sphi 0, %s35
    %s36 = sphi 0, %s33
    %s37 = sphi 0, %s36
    %s53 = sphi 0, %s37
    %s61 = sphi 0, %s63
    %s64 = sphi 0, %s61
    %s65 = sphi 0, %s64
    %s81 = sphi 0, %s65
    %s89 = sphi 0, %s91
    %s92 = sphi 0, %s89
    %s93 = sphi 0, %s92
    %s109 = sphi 0, %s93
    %s117 = sphi 0, %s119
    %s120 = sphi 0, %s117
    %s121 = sphi 0, %s120
    %s137 = sphi 0, %s121
  $region4: #{multi_head_attention.4} parent=0 // loop_header_branch
    %12 = sbr.rel (%p10) target = $region8
  $region5: #{multi_head_attention.4} parent=0 // loop_body
    %s14 = ssub.s32 %s9, 1
    %s15 = ssub.s32 %s9, 2
    %s22 = sadd.s32 1, %s17
    %p23 = scmp.ge.s32.totalorder %s22, 4
    %s24 = scalar_select %p23, 0, %s22
    %s25 = sadd.s32 1, %s16
    %s26 = scalar_select %p23, %s25, %s16
    %p27 = scmp.ge.s32.totalorder %s26, 2
    %s28 = scalar_select %p27, 0, %s26
    %s29 = ssub.s32 %s16, %s28
    %s30 = ssub.s32 %s17, %s24
    %s31 = sor.u32 %s29, %s30
    %p32 = scmp.eq.s32.totalorder %s31, 0
    %s34 = sadd.s32 %s33, 1
    %s35 = scalar_select %p32, %s33, %s34
    %p38 = pneg %p32
    %p39 = scmp.eq.s32.totalorder %s9, 7
    %p40 = por %p38, %p39
    %p41 = scmp.ne.s32.totalorder %s33, %s36
    %p42 = scmp.eq.s32.totalorder %s9, 0
    %p43 = por %p41, %p42
    %p44 = scmp.ne.s32.totalorder %s33, %s36
    %p45 = scmp.eq.s32.totalorder %s14, 7
    %p46 = por %p44, %p45
    %p47 = scmp.ne.s32.totalorder %s36, %s37
    %p48 = scmp.eq.s32.totalorder %s14, 0
    %p49 = por %p47, %p48
    %p50 = scmp.ne.s32.totalorder %s36, %s37
    %p51 = scmp.eq.s32.totalorder %s15, 7
    %p52 = por %p50, %p51
    %p54 = scmp.ne.s32.totalorder %s37, %s53
    %p55 = scmp.eq.s32.totalorder %s15, 0
    %p56 = por %p54, %p55
    %s57 = ssub.s32 %s16, %s28
    %s58 = ssub.s32 %s17, %s24
    %s59 = sor.u32 %s57, %s58
    %p60 = scmp.eq.s32.totalorder %s59, 0
    %s62 = sadd.s32 %s61, 1
    %s63 = scalar_select %p60, %s61, %s62
    %p66 = pneg %p60
    %p67 = scmp.eq.s32.totalorder %s9, 7
    %p68 = por %p66, %p67
    %p69 = scmp.ne.s32.totalorder %s61, %s64
    %p70 = scmp.eq.s32.totalorder %s9, 0
    %p71 = por %p69, %p70
    %p72 = scmp.ne.s32.totalorder %s61, %s64
    %p73 = scmp.eq.s32.totalorder %s14, 7
    %p74 = por %p72, %p73
    %p75 = scmp.ne.s32.totalorder %s64, %s65
    %p76 = scmp.eq.s32.totalorder %s14, 0
    %p77 = por %p75, %p76
    %p78 = scmp.ne.s32.totalorder %s64, %s65
    %p79 = scmp.eq.s32.totalorder %s15, 7
    %p80 = por %p78, %p79
    %p82 = scmp.ne.s32.totalorder %s65, %s81
    %p83 = scmp.eq.s32.totalorder %s15, 0
    %p84 = por %p82, %p83
    %s85 = ssub.s32 %s16, %s28
    %s86 = ssub.s32 %s17, %s24
    %s87 = sor.u32 %s85, %s86
    %p88 = scmp.eq.s32.totalorder %s87, 0
    %s90 = sadd.s32 %s89, 1
    %s91 = scalar_select %p88, %s89, %s90
    %p94 = pneg %p88
    %p95 = scmp.eq.s32.totalorder %s9, 7
    %p96 = por %p94, %p95
    %p97 = scmp.ne.s32.totalorder %s89, %s92
    %p98 = scmp.eq.s32.totalorder %s9, 0
    %p99 = por %p97, %p98
    %p100 = scmp.ne.s32.totalorder %s89, %s92
    %p101 = scmp.eq.s32.totalorder %s14, 7
    %p102 = por %p100, %p101
    %p103 = scmp.ne.s32.totalorder %s92, %s93
    %p104 = scmp.eq.s32.totalorder %s14, 0
    %p105 = por %p103, %p104
    %p106 = scmp.ne.s32.totalorder %s92, %s93
    %p107 = scmp.eq.s32.totalorder %s15, 7
    %p108 = por %p106, %p107
    %p110 = scmp.ne.s32.totalorder %s93, %s109
    %p111 = scmp.eq.s32.totalorder %s15, 0
    %p112 = por %p110, %p111
    %s113 = ssub.s32 %s16, %s28
    %s114 = ssub.s32 %s17, %s24
    %s115 = sor.u32 %s113, %s114
    %p116 = scmp.eq.s32.totalorder %s115, 0
    %s118 = sadd.s32 %s117, 1
    %s119 = scalar_select %p116, %s117, %s118
    %p122 = pneg %p116
    %p123 = scmp.eq.s32.totalorder %s9, 7
    %p124 = por %p122, %p123
    %p125 = scmp.ne.s32.totalorder %s117, %s120
    %p126 = scmp.eq.s32.totalorder %s9, 0
    %p127 = por %p125, %p126
    %p128 = scmp.ne.s32.totalorder %s117, %s120
    %p129 = scmp.eq.s32.totalorder %s14, 7
    %p130 = por %p128, %p129
    %p131 = scmp.ne.s32.totalorder %s120, %s121
    %p132 = scmp.eq.s32.totalorder %s14, 0
    %p133 = por %p131, %p132
    %p134 = scmp.ne.s32.totalorder %s120, %s121
    %p135 = scmp.eq.s32.totalorder %s15, 7
    %p136 = por %p134, %p135
    %p138 = scmp.ne.s32.totalorder %s121, %s137
    %p139 = scmp.eq.s32.totalorder %s15, 0
    %p140 = por %p138, %p139
    %p141 = scmp.le.s32.totalorder 1, %s9
    %p142 = scmp.lt.s32.totalorder %s9, 9
    %p143 = pnand %p141, %p142
    %p144 = pneg %p143
    // Predicated region
    $region9: #{multi_head_attention.4} parent=5 // pred_check
      _
    $region10: #{multi_head_attention.4} parent=5 // pred_check_branch
      %146 = sbr.rel (%p143) target = $region12
    $region11: #{multi_head_attention.4} parent=5 // pred_region
      %s147 = ssub.s32 %s9, 1
    $region12: #{multi_head_attention.4} parent=5 // pred_fallthru
      _
    %p148 = scmp.lt.s32.totalorder %s9, 8
    // Predicated region
    $region13: #{multi_head_attention.4} parent=5 // pred_check
      %p149 = pneg %p148
    $region14: #{multi_head_attention.4} parent=5 // pred_check_branch
      %151 = sbr.rel (%p149) target = $region16
    $region15: #{multi_head_attention.4} parent=5 // pred_region
      // Predicated region
      $region17: #{multi_head_attention.4} parent=15 // pred_check
        %p152 = pneg %p43
      $region18: #{multi_head_attention.4} parent=15 // pred_check_branch
        %154 = sbr.rel (%p152) target = $region20
      $region19: #{multi_head_attention.4} parent=15 // pred_region
        %p155 = scmp.lt.s32.totalorder %s16, 1
        %s156 = scalar_select %p155, %s16, 1
        %p157 = scmp.lt.s32.totalorder %s17, 3
        %s158 = scalar_select %p157, %s17, 3
        %s159 = smul.addr %s156, 4
        %s160 = sadd.s32 %s158, %s159
        %s161 = smul.addr %s160, 8
        %s162 = scalar_lea.vmem %s0, %s161
      $region20: #{multi_head_attention.4} parent=15 // pred_fallthru
        _
      // Predicated region
      $region21: #{multi_head_attention.4} parent=15 // pred_check
        %p163 = pneg %p71
      $region22: #{multi_head_attention.4} parent=15 // pred_check_branch
        %165 = sbr.rel (%p163) target = $region24
      $region23: #{multi_head_attention.4} parent=15 // pred_region
        %p166 = scmp.lt.s32.totalorder %s16, 1
        %s167 = scalar_select %p166, %s16, 1
        %p168 = scmp.lt.s32.totalorder %s17, 3
        %s169 = scalar_select %p168, %s17, 3
        %s170 = smul.addr %s167, 4
        %s171 = sadd.s32 %s169, %s170
        %s172 = smul.addr %s171, 8
        %s173 = scalar_lea.vmem %s1, %s172
      $region24: #{multi_head_attention.4} parent=15 // pred_fallthru
        _
      // Predicated region
      $region25: #{multi_head_attention.4} parent=15 // pred_check
        %p174 = pneg %p99
      $region26: #{multi_head_attention.4} parent=15 // pred_check_branch
        %176 = sbr.rel (%p174) target = $region28
      $region27: #{multi_head_attention.4} parent=15 // pred_region
        %p177 = scmp.lt.s32.totalorder %s16, 1
        %s178 = scalar_select %p177, %s16, 1
        %p179 = scmp.lt.s32.totalorder %s17, 3
        %s180 = scalar_select %p179, %s17, 3
        %s181 = smul.addr %s178, 4
        %s182 = sadd.s32 %s180, %s181
        %s183 = smul.addr %s182, 8
        %s184 = scalar_lea.vmem %s2, %s183
      $region28: #{multi_head_attention.4} parent=15 // pred_fallthru
        _
    $region16: #{multi_head_attention.4} parent=5 // pred_fallthru
      _
    %p185 = scmp.le.s32.totalorder 1, %s9
    %p186 = scmp.lt.s32.totalorder %s9, 9
    %p187 = pnand %p185, %p186
    %p188 = pneg %p187
    // Predicated region
    $region29: #{multi_head_attention.4} parent=5 // pred_check
      _
    $region30: #{multi_head_attention.4} parent=5 // pred_check_branch
      %190 = sbr.rel (%p187) target = $region32
    $region31: #{multi_head_attention.4} parent=5 // pred_region
      %s191 = ssub.s32 %s9, 1
      %p192 = scmp.lt.s32.totalorder %s18, 1
      %s193 = scalar_select %p192, %s18, 1
      %p194 = scmp.lt.s32.totalorder %s19, 3
      %s195 = scalar_select %p194, %s19, 3
      %s196 = smul.addr %s193, 4
      %s197 = sadd.s32 %s195, %s196
      %s198 = smul.addr %s197, 8
      %s199 = scalar_lea.vmem %s0, %s198
      %p200 = pneg %p49
      %p201 = pneg %p46
      %p202 = scmp.lt.s32.totalorder %s18, 1
      %s203 = scalar_select %p202, %s18, 1
      %p204 = scmp.lt.s32.totalorder %s19, 3
      %s205 = scalar_select %p204, %s19, 3
      %s206 = smul.addr %s203, 4
      %s207 = sadd.s32 %s205, %s206
      %s208 = smul.addr %s207, 8
      %s209 = scalar_lea.vmem %s1, %s208
      %p210 = pneg %p77
      %p211 = pneg %p74
      %p212 = scmp.lt.s32.totalorder %s18, 1
      %s213 = scalar_select %p212, %s18, 1
      %p214 = scmp.lt.s32.totalorder %s19, 3
      %s215 = scalar_select %p214, %s19, 3
      %s216 = smul.addr %s213, 4
      %s217 = sadd.s32 %s215, %s216
      %s218 = smul.addr %s217, 8
      %s219 = scalar_lea.vmem %s2, %s218
      %p220 = pneg %p105
      %p221 = pneg %p102
      %p222 = pneg %p133
      %p223 = pneg %p130
      %p224 = scmp.lt.s32.totalorder %s18, 1
      %s225 = scalar_select %p224, %s18, 1
      %p226 = scmp.lt.s32.totalorder %s19, 3
      %s227 = scalar_select %p226, %s19, 3
      %s228 = smul.addr %s225, 4
      %s229 = sadd.s32 %s227, %s228
      %s230 = smul.addr %s229, 8
      %s231 = scalar_lea.vmem %s3, %s230
      %p232 = scmp.lt.s32.totalorder %s18, 1
      %s233 = scalar_select %p232, %s18, 1
      %p234 = scmp.lt.s32.totalorder %s19, 3
      %s235 = scalar_select %p234, %s19, 3
      %s236 = smul.addr %s233, 4
      %s237 = sadd.s32 %s235, %s236
      %s238 = smul.addr %s237, 8
      %s239 = scalar_lea.vmem %s0, %s238
      %p240 = scmp.lt.s32.totalorder %s18, 1
      %s241 = scalar_select %p240, %s18, 1
      %p242 = scmp.lt.s32.totalorder %s19, 3
      %s243 = scalar_select %p242, %s19, 3
      %s244 = smul.addr %s241, 4
      %s245 = sadd.s32 %s243, %s244
      %s246 = smul.addr %s245, 8
      %s247 = scalar_lea.vmem %s1, %s246
      %p248 = scmp.lt.s32.totalorder %s18, 1
      %s249 = scalar_select %p248, %s18, 1
      %p250 = scmp.lt.s32.totalorder %s19, 3
      %s251 = scalar_select %p250, %s19, 3
      %s252 = smul.addr %s249, 4
      %s253 = sadd.s32 %s251, %s252
      %s254 = smul.addr %s253, 8
      %s255 = scalar_lea.vmem %s2, %s254
      %p256 = scmp.lt.s32.totalorder %s18, 1
      %s257 = scalar_select %p256, %s18, 1
      %p258 = scmp.lt.s32.totalorder %s19, 3
      %s259 = scalar_select %p258, %s19, 3
      %s260 = smul.addr %s257, 4
      %s261 = sadd.s32 %s259, %s260
      %s262 = smul.addr %s261, 8
      %s263 = scalar_lea.vmem %s3, %s262
      %v265 = vld [vmem:[%s239] sm:$0xff]
      %v266 = vmul.f32 %v265, 0.35355338
      %v267 = vpack.c.bf16 %v266, %v266
      %v268 = vld [vmem:[%s247] sm:$0xff]
      %v269 = vpack.c.bf16 %v268, %v268
      %vm270 = vcmask 64512
      %v272 = vsel %vm270, %v267, 0
      %v275 = vsel %vm270, %v269, 0
      %277 = vmatprep.subr.bf16.mxu0 0
      %278 = vmatpush1.bf16.xpose.msra.mxu0 %v275
      %279 = vmatprep.subr.bf16.mxu0 0
      %280 = vmatpush1.bf16.xpose.msra.mxu0 0
      %281 = vmatprep.subr.bf16.mxu0 0
      %282 = vmatpush1.bf16.xpose.msra.mxu0 0
      %283 = vmatprep.subr.bf16.mxu0 0
      %284 = vmatpush1.bf16.xpose.msra.mxu0 0
      %285 = vmatprep.subr.bf16.mxu0 0
      %286 = vmatpush1.bf16.xpose.msra.mxu0 0
      %287 = vmatprep.subr.bf16.mxu0 0
      %288 = vmatpush1.bf16.xpose.msra.mxu0 0
      %289 = vmatprep.subr.bf16.mxu0 0
      %290 = vmatpush1.bf16.xpose.msra.mxu0 0
      %291 = vmatprep.subr.bf16.mxu0 0
      %292 = vmatpush1.bf16.xpose.msra.mxu0 0
      %293 = vmatprep.subr.bf16.mxu0 0
      %294 = vmatpush1.bf16.xpose.msra.mxu0 0
      %295 = vmatprep.subr.bf16.mxu0 0
      %296 = vmatpush1.bf16.xpose.msra.mxu0 0
      %297 = vmatprep.subr.bf16.mxu0 0
      %298 = vmatpush1.bf16.xpose.msra.mxu0 0
      %299 = vmatprep.subr.bf16.mxu0 0
      %300 = vmatpush1.bf16.xpose.msra.mxu0 0
      %301 = vmatprep.subr.bf16.mxu0 0
      %302 = vmatpush1.bf16.xpose.msra.mxu0 0
      %303 = vmatprep.subr.bf16.mxu0 0
      %304 = vmatpush1.bf16.xpose.msra.mxu0 0
      %305 = vmatprep.subr.bf16.mxu0 0
      %306 = vmatpush1.bf16.xpose.msra.mxu0 0
      %307 = vmatprep.subr.bf16.mxu0 0
      %308 = vmatpush1.bf16.xpose.msra.mxu0 0
      %309 = vmatprep.mubr.bf16.mxu0 0
      %310 = vmatmul.mubr.bf16.gmra.mrb[0].mxu0 %v272
      %v311 = vpop.f32.mrb[0].mxu0
      %v312 = vadd.f32 0.0, %v311
      %v313 = vpop.f32.mrb[0].mxu0
      %v314 = vpop.f32.mrb[0].mxu0
      %v315 = vpop.f32.mrb[0].mxu0
      %316 = vdwg.mxu0
      %v317 = vlaneseq
      %v318 = vshrl.u32 %v317, 7
      %v319 = vlaneseq
      %v320 = vand.u32 %v319, 127
      %vm321 = vcmp.ge.s32.totalorder %v318, %v320
      %v322 = vsel %vm321, %v312, -inf
      %v323 = vsel %vm270, %v322, -inf
      %324 = vmax.xlane.f32.xlu0 %v323
      %v325 = vpop.xlane.xlu0 %324
      %v326 = vsub.f32 %v322, %v325
      %v327 = vmul.f32 %v326, 1.442695
      %v328 = vpow.pop %v327
      %v329 = vsel %vm270, %v328, 0.0
      %330 = vadd.xlane.f32.xlu0 %v329
      %v331 = vpop.xlane.xlu0 %330
      %v332 = vrcp.pop %v331
      %v333 = vmul.f32 %v328, %v332
      %v334 = vpack.c.bf16 %v333, %v333
      %v335 = vld [vmem:[%s255] sm:$0xff]
      %v336 = vpack.c.bf16 %v335, %v335
      %v338 = vsel %vm270, %v334, 0
      %vm340 = vcmask 1043456
      %v342 = vsel %vm340, %v336, 0
      %344 = vmatprep.subr.bf16.mxu0 0
      %345 = vmatpush1.bf16.msra.mxu0 %v342
      %346 = vmatprep.subr.bf16.mxu0 0
      %347 = vmatpush1.bf16.msra.mxu0 0
      %348 = vmatprep.subr.bf16.mxu0 0
      %349 = vmatpush1.bf16.msra.mxu0 0
      %350 = vmatprep.subr.bf16.mxu0 0
      %351 = vmatpush1.bf16.msra.mxu0 0
      %352 = vmatprep.subr.bf16.mxu0 0
      %353 = vmatpush1.bf16.msra.mxu0 0
      %354 = vmatprep.subr.bf16.mxu0 0
      %355 = vmatpush1.bf16.msra.mxu0 0
      %356 = vmatprep.subr.bf16.mxu0 0
      %357 = vmatpush1.bf16.msra.mxu0 0
      %358 = vmatprep.subr.bf16.mxu0 0
      %359 = vmatpush1.bf16.msra.mxu0 0
      %360 = vmatprep.subr.bf16.mxu0 0
      %361 = vmatpush1.bf16.msra.mxu0 0
      %362 = vmatprep.subr.bf16.mxu0 0
      %363 = vmatpush1.bf16.msra.mxu0 0
      %364 = vmatprep.subr.bf16.mxu0 0
      %365 = vmatpush1.bf16.msra.mxu0 0
      %366 = vmatprep.subr.bf16.mxu0 0
      %367 = vmatpush1.bf16.msra.mxu0 0
      %368 = vmatprep.subr.bf16.mxu0 0
      %369 = vmatpush1.bf16.msra.mxu0 0
      %370 = vmatprep.subr.bf16.mxu0 0
      %371 = vmatpush1.bf16.msra.mxu0 0
      %372 = vmatprep.subr.bf16.mxu0 0
      %373 = vmatpush1.bf16.msra.mxu0 0
      %374 = vmatprep.subr.bf16.mxu0 0
      %375 = vmatpush1.bf16.msra.mxu0 0
      %376 = vmatprep.mubr.bf16.mxu0 0
      %377 = vmatmul.mubr.bf16.gmra.mrb[0].mxu0 %v338
      %v378 = vpop.f32.mrb[0].mxu0
      %v379 = vadd.f32 0.0, %v378
      %v380 = vpop.f32.mrb[0].mxu0
      %v381 = vpop.f32.mrb[0].mxu0
      %v382 = vpop.f32.mrb[0].mxu0
      %383 = vdwg.mxu0
      %384 = vst.msk [vmem:[%s263] sm:$0xff] %vm270, %v379
      %p385 = scmp.lt.s32.totalorder %s18, 1
      %s386 = scalar_select %p385, %s18, 1
      %p387 = scmp.lt.s32.totalorder %s19, 3
      %s388 = scalar_select %p387, %s19, 3
      %s389 = smul.addr %s386, 4
      %s390 = sadd.s32 %s388, %s389
      %s391 = smul.addr %s390, 8
      %s392 = scalar_lea.vmem %s3, %s391
      // Predicated region
      $region33: #{multi_head_attention.4} parent=31 // pred_check
        %p393 = pneg %p130
      $region34: #{multi_head_attention.4} parent=31 // pred_check_branch
        %395 = sbr.rel (%p393) target = $region36
      $region35: #{multi_head_attention.4} parent=31 // pred_region
        _
      $region36: #{multi_head_attention.4} parent=31 // pred_fallthru
        _
    $region32: #{multi_head_attention.4} parent=5 // pred_fallthru
      _
    %p396 = scmp.le.s32.totalorder 2, %s9
    // Predicated region
    $region37: #{multi_head_attention.4} parent=5 // pred_check
      %p397 = pneg %p396
    $region38: #{multi_head_attention.4} parent=5 // pred_check_branch
      %399 = sbr.rel (%p397) target = $region40
    $region39: #{multi_head_attention.4} parent=5 // pred_region
      %s400 = ssub.s32 %s9, 2
      // Predicated region
      $region41: #{multi_head_attention.4} parent=39 // pred_check
        %p401 = pneg %p136
      $region42: #{multi_head_attention.4} parent=39 // pred_check_branch
        %403 = sbr.rel (%p401) target = $region44
      $region43: #{multi_head_attention.4} parent=39 // pred_region
        %p404 = scmp.lt.s32.totalorder %s20, 1
        %s405 = scalar_select %p404, %s20, 1
        %p406 = scmp.lt.s32.totalorder %s21, 3
        %s407 = scalar_select %p406, %s21, 3
        %s408 = smul.addr %s405, 4
        %s409 = sadd.s32 %s407, %s408
        %s410 = smul.addr %s409, 8
        %s411 = scalar_lea.vmem %s3, %s410
      $region44: #{multi_head_attention.4} parent=39 // pred_fallthru
        _
    $region40: #{multi_head_attention.4} parent=5 // pred_fallthru
      _
  $region6: #{multi_head_attention.4} parent=0 // loop_footer
    %s13 = sadd.s32 1, %s9
  $region7: #{multi_head_attention.4} parent=0 // loop_footer_branch
    %8 = sbr.rel target = $region3
  $region8: #{multi_head_attention.4} parent=0 // loop_exit
    _

</llo_original>
